<compile_context>
chip_gen: v7x
topology: tpu7x:2x2x1
jax: 0.10.0
libtpu: 0.0.40
codegen_flags: <defaults>
</compile_context>

<pallas_src>
import jax
import jax.numpy as jnp
from jax import lax
from jax.experimental import pallas as pl
from jax.experimental.pallas import tpu as pltpu

MARGIN = 1.0


# ----------------------------------------------------------------------------
# Fused kernel: build A+I -> GCN layer -> one-hot triplet gather -> MLP -> loss
# ----------------------------------------------------------------------------
def _fused_kernel(edge_ref, tidx_ref,                     # int32 (2,E), (3B,1)
                  x_ref, wg_ref, bg_ref,
                  w1_ref, b1_ref, w2_ref, b2_ref,
                  loss_ref):                              # SMEM (1,1) f32 output
    f32 = jnp.float32
    N = x_ref.shape[0]
    E = edge_ref.shape[1]
    TB = tidx_ref.shape[0]                                # 3 * B
    B = TB // 3

    # Contract last dims of both operands ("rhs transposed" matmul).
    dn_tb = (((1,), (1,)), ((), ()))

    # ---- Build A + I in-kernel from edge_index (one-hot matmuls on the MXU) --
    src = edge_ref[0:1, :]                                # (1, E) int32
    dst = edge_ref[1:2, :]                                # (1, E) int32
    node_ids = lax.broadcasted_iota(jnp.int32, (N, E), 0)
    ohT_src = (node_ids == src).astype(f32)               # (N, E): [i,e]=1 iff src[e]==i
    ohT_dst = (node_ids == dst).astype(f32)
    adj = (lax.dot_general(ohT_src, ohT_dst, dn_tb, preferred_element_type=f32) +
           lax.dot_general(ohT_dst, ohT_src, dn_tb, preferred_element_type=f32))
    adj = jnp.minimum(adj, 1.0)      # .set() semantics: binarize dup / bidirectional edges
    eye = (lax.broadcasted_iota(jnp.int32, (N, N), 0)
           == lax.broadcasted_iota(jnp.int32, (N, N), 1)).astype(f32)
    adj = adj + eye                                       # A + I

    # ---- GCN layer: H = relu( D^-1/2 (A+I) D^-1/2 X W + b ) ------------------
    deg = jnp.sum(adj, axis=1, keepdims=True)             # (N, 1)  XLU reduce
    dinv = lax.rsqrt(deg)                                 # (N, 1)  EUP (deg >= 1 thanks to +I)
    xs = x_ref[...] * dinv                                # == (A_hat col-scale) folded into X

    c_in, c_gcn = wg_ref.shape
    # Contract the N^2 matmul over the smaller feature dim (static branch).
    if c_gcn < c_in:
        xw = jnp.dot(xs, wg_ref[...], preferred_element_type=f32)
        agg = jnp.dot(adj, xw, preferred_element_type=f32)
    else:
        ax = jnp.dot(adj, xs, preferred_element_type=f32)
        agg = jnp.dot(ax, wg_ref[...], preferred_element_type=f32)
    h = jnp.maximum(dinv * agg + bg_ref[...], 0.0)        # (N, c_gcn)

    # ---- One-hot triplet row selection (MXU) fused with MLP layer 1 ----------
    sel = (lax.broadcasted_iota(jnp.int32, (TB, N), 1)
           == tidx_ref[...]).astype(f32)                  # (3B, N) one-hot rows

    if N <= TB:
        # Fold layer-1 before the gather: fewer FLOPs when N < 3B and the gather
        # is off the critical path of the first MLP matmul.
        hw1 = jnp.dot(h, w1_ref[...], preferred_element_type=f32)          # (N, hid)
        h1 = jnp.maximum(jnp.dot(sel, hw1, preferred_element_type=f32)
                         + b1_ref[...], 0.0)                               # (3B, hid)
    else:
        trip = jnp.dot(sel, h, preferred_element_type=f32)                 # (3B, c_gcn)
        h1 = jnp.maximum(jnp.dot(trip, w1_ref[...], preferred_element_type=f32)
                         + b1_ref[...], 0.0)
    emb = jnp.dot(h1, w2_ref[...], preferred_element_type=f32) + b2_ref[...]

    ea = emb[0:B, :]
    ep = emb[B:2 * B, :]
    en = emb[2 * B:3 * B, :]

    # ---- Triplet loss (squared Euclidean, margin hinge, mean) ----------------
    # TODO(synk): if the original TripletLoss is nn.TripletMarginLoss (true p=2
    # norm), wrap d_ap/d_an in sqrt(. + 1e-6) before the hinge.
    d_ap = jnp.sum((ea - ep) ** 2, axis=-1, keepdims=True)   # (B, 1)
    d_an = jnp.sum((ea - en) ** 2, axis=-1, keepdims=True)   # (B, 1)
    losses = jnp.maximum(d_ap - d_an + MARGIN, 0.0)
    loss_ref[0, 0] = jnp.sum(losses) * (1.0 / B)


# ----------------------------------------------------------------------------
# Full model forward (only glue left: tiny triplet-index concat / int32 casts)
# ----------------------------------------------------------------------------
def gcn_mlp_triplet_forward(params, x, edge_index, anchor_idx, positive_idx,
                            negative_idx):
    N, c_in = x.shape
    c_gcn = params["w_gcn"].shape[1]
    hid = params["w1"].shape[1]
    d_out = params["w2"].shape[1]
    E = edge_index.shape[1]
    B = anchor_idx.shape[0]

    # Stack triplet indices into one (3B, 1) int32 column (tiny XLA glue; all the
    # dense work happens inside the single pallas_call).
    trip_idx = jnp.concatenate([anchor_idx, positive_idx, negative_idx]
                               ).astype(jnp.int32).reshape(3 * B, 1)
    edge = edge_index.astype(jnp.int32)                    # (2, E)

    inputs = (edge, trip_idx, x,
              params["w_gcn"], params["b_gcn"],
              params["w1"], params["b1"],
              params["w2"], params["b2"])

    def full(arr):
        nd = arr.ndim
        return pl.BlockSpec(arr.shape, lambda i, _nd=nd: (0,) * _nd)

    # Advisory cost hint so XLA schedules the surrounding glue around the call.
    mlp1_rows = N if N <= 3 * B else 3 * B
    gather_k = hid if N <= 3 * B else c_gcn
    flops = 2 * (2 * N * E * N                      # in-kernel A+I one-hot matmuls
                 + N * N * min(c_in, c_gcn)         # adjacency aggregation
                 + N * c_in * c_gcn                 # GCN weight matmul
                 + mlp1_rows * c_gcn * hid          # MLP layer 1
                 + 3 * B * N * gather_k             # one-hot gather matmul
                 + 3 * B * hid * d_out)             # MLP layer 2
    bytes_accessed = sum(int(a.size) * a.dtype.itemsize for a in inputs) + 4
    cost = pl.CostEstimate(flops=int(flops), transcendentals=int(N),
                           bytes_accessed=int(bytes_accessed))

    grid_spec = pl.GridSpec(
        grid=(1,),
        in_specs=[full(a) for a in inputs],
        out_specs=pl.BlockSpec(memory_space=pltpu.MemorySpace.SMEM),
    )

    loss = pl.pallas_call(
        _fused_kernel,
        out_shape=jax.ShapeDtypeStruct((1, 1), jnp.float32),
        grid_spec=grid_spec,
        compiler_params=pltpu.CompilerParams(dimension_semantics=("arbitrary",)),
        cost_estimate=cost,
    )(*inputs)
    return loss[0, 0]


# ----------------------------------------------------------------------------
# Deterministic parameter init (shapes implied by module __init__)
# ----------------------------------------------------------------------------
def init_params(key, gcn_in, gcn_out, mlp_hidden, mlp_out):
    k1, k2, k3 = jax.random.split(key, 3)
    scale = lambda fan_in: 1.0 / jnp.sqrt(jnp.float32(fan_in))
    return {
        "w_gcn": jax.random.normal(k1, (gcn_in, gcn_out), jnp.float32) * scale(gcn_in),
        "b_gcn": jnp.zeros((1, gcn_out), jnp.float32),
        "w1": jax.random.normal(k2, (gcn_out, mlp_hidden), jnp.float32) * scale(gcn_out),
        "b1": jnp.zeros((1, mlp_hidden), jnp.float32),
        "w2": jax.random.normal(k3, (mlp_hidden, mlp_out), jnp.float32) * scale(mlp_hidden),
        "b2": jnp.zeros((1, mlp_out), jnp.float32),
    }


if __name__ == "__main__":
    # Small shapes consistent with the module's forward.
    N = 8              # number of graph nodes
    GCN_IN = 16
    GCN_OUT = 32
    MLP_HIDDEN = 32
    MLP_OUT = 16
    B = 4              # number of triplets

    key = jax.random.PRNGKey(0)
    kx, kp = jax.random.split(key)

    # Node features and a simple ring graph.
    x = jax.random.normal(kx, (N, GCN_IN), jnp.float32)
    src = jnp.arange(N, dtype=jnp.int32)
    dst = (src + 1) % N
    edge_index = jnp.stack([src, dst], axis=0)           # [2, E]

    anchor_idx = jnp.array([0, 1, 2, 3], jnp.int32)
    positive_idx = jnp.array([1, 2, 3, 4], jnp.int32)
    negative_idx = jnp.array([5, 6, 7, 0], jnp.int32)

    params = init_params(kp, GCN_IN, GCN_OUT, MLP_HIDDEN, MLP_OUT)

    loss = gcn_mlp_triplet_forward(params, x, edge_index,
                                   anchor_idx, positive_idx, negative_idx)
    loss = jax.block_until_ready(loss)

    # Pure-JAX reference check of the same math.
    def ref():
        adj = jnp.zeros((N, N), jnp.float32).at[src, dst].set(1.0).at[dst, src].set(1.0)
        adj = adj + jnp.eye(N)
        dis = 1.0 / jnp.sqrt(adj.sum(1))
        a_hat = adj * dis[:, None] * dis[None, :]
        h = jnp.maximum(a_hat @ x @ params["w_gcn"] + params["b_gcn"], 0.0)

        def mlp(z):
            return jnp.maximum(z @ params["w1"] + params["b1"], 0.0) @ params["w2"] + params["b2"]

        ea, ep, en = mlp(h[anchor_idx]), mlp(h[positive_idx]), mlp(h[negative_idx])
        dp = jnp.sum((ea - ep) ** 2, -1)
        dneg = jnp.sum((ea - en) ** 2, -1)
        return jnp.mean(jnp.maximum(dp - dneg + MARGIN, 0.0))

    assert jnp.allclose(loss, ref(), rtol=1e-5, atol=1e-5), (loss, ref())
    print("KERNEL_OK")
</pallas_src>

<mosaic_0001>
module attributes {stable_mosaic.version = 11 : i64} {
  func.func @_fused_kernel(%arg0: i32, %arg1: memref<2x8xi32, #tpu.memory_space<vmem>>, %arg2: memref<12x1xi32, #tpu.memory_space<vmem>>, %arg3: memref<8x16xf32, #tpu.memory_space<vmem>>, %arg4: memref<16x32xf32, #tpu.memory_space<vmem>>, %arg5: memref<1x32xf32, #tpu.memory_space<vmem>>, %arg6: memref<32x32xf32, #tpu.memory_space<vmem>>, %arg7: memref<1x32xf32, #tpu.memory_space<vmem>>, %arg8: memref<32x16xf32, #tpu.memory_space<vmem>>, %arg9: memref<1x16xf32, #tpu.memory_space<vmem>>, %arg10: memref<1x1xf32, #tpu.memory_space<smem>>) attributes {dimension_semantics = [#tpu.dimension_semantics<arbitrary>], iteration_bounds = array<i64: 1>, scalar_prefetch = 0 : i64, scratch_operands = 0 : i64, tpu.core_type = #tpu.core_type<tc>, window_params = [{pipeline_mode = #tpu.pipeline_mode<synchronous>, transform_indices = @transform_0, window_bounds = array<i64: 2, 8>}, {pipeline_mode = #tpu.pipeline_mode<synchronous>, transform_indices = @transform_1, window_bounds = array<i64: 12, 1>}, {pipeline_mode = #tpu.pipeline_mode<synchronous>, transform_indices = @transform_2, window_bounds = array<i64: 8, 16>}, {pipeline_mode = #tpu.pipeline_mode<synchronous>, transform_indices = @transform_3, window_bounds = array<i64: 16, 32>}, {pipeline_mode = #tpu.pipeline_mode<synchronous>, transform_indices = @transform_4, window_bounds = array<i64: 1, 32>}, {pipeline_mode = #tpu.pipeline_mode<synchronous>, transform_indices = @transform_5, window_bounds = array<i64: 32, 32>}, {pipeline_mode = #tpu.pipeline_mode<synchronous>, transform_indices = @transform_6, window_bounds = array<i64: 1, 32>}, {pipeline_mode = #tpu.pipeline_mode<synchronous>, transform_indices = @transform_7, window_bounds = array<i64: 32, 16>}, {pipeline_mode = #tpu.pipeline_mode<synchronous>, transform_indices = @transform_8, window_bounds = array<i64: 1, 16>}, {transform_indices = @transform_9, window_bounds = array<i64: 1, 1>}]} {
    %c0 = arith.constant 0 : index
    %c0_0 = arith.constant 0 : index
    %0 = vector.load %arg1[%c0, %c0_0] : memref<2x8xi32, #tpu.memory_space<vmem>>, vector<1x8xi32>
    %c1 = arith.constant 1 : index
    %c0_1 = arith.constant 0 : index
    %1 = vector.load %arg1[%c1, %c0_1] : memref<2x8xi32, #tpu.memory_space<vmem>>, vector<1x8xi32>
    %2 = tpu.iota {dimensions = array<i32: 0>} : vector<8x8xi32>
    %3 = vector.broadcast %0 : vector<1x8xi32> to vector<8x8xi32>
    %4 = arith.cmpi eq, %2, %3 : vector<8x8xi32>
    %5 = arith.extui %4 : vector<8x8xi1> to vector<8x8xi32>
    %6 = arith.sitofp %5 : vector<8x8xi32> to vector<8x8xf32>
    %7 = vector.broadcast %1 : vector<1x8xi32> to vector<8x8xi32>
    %8 = arith.cmpi eq, %2, %7 : vector<8x8xi32>
    %9 = arith.extui %8 : vector<8x8xi1> to vector<8x8xi32>
    %10 = arith.sitofp %9 : vector<8x8xi32> to vector<8x8xf32>
    %cst = arith.constant dense<0.000000e+00> : vector<8x8xf32>
    %11 = tpu.matmul %6, %10, %cst {dimension_numbers = #tpu.dot_dimension_numbers<[1], [1], [0], [0], [0, 0, 1, 0], [], []>} : vector<8x8xf32>, vector<8x8xf32>, vector<8x8xf32> -> vector<8x8xf32>
    %cst_2 = arith.constant dense<0.000000e+00> : vector<8x8xf32>
    %12 = tpu.matmul %10, %6, %cst_2 {dimension_numbers = #tpu.dot_dimension_numbers<[1], [1], [0], [0], [0, 0, 1, 0], [], []>} : vector<8x8xf32>, vector<8x8xf32>, vector<8x8xf32> -> vector<8x8xf32>
    %13 = arith.addf %11, %12 : vector<8x8xf32>
    %cst_3 = arith.constant 1.000000e+00 : f32
    %14 = vector.broadcast %cst_3 : f32 to vector<8x8xf32>
    %15 = arith.minimumf %13, %14 : vector<8x8xf32>
    %16 = tpu.iota {dimensions = array<i32: 0>} : vector<8x8xi32>
    %17 = tpu.iota {dimensions = array<i32: 1>} : vector<8x8xi32>
    %18 = arith.cmpi eq, %16, %17 : vector<8x8xi32>
    %19 = arith.extui %18 : vector<8x8xi1> to vector<8x8xi32>
    %20 = arith.sitofp %19 : vector<8x8xi32> to vector<8x8xf32>
    %21 = arith.addf %15, %20 : vector<8x8xf32>
    %cst_4 = arith.constant dense<0.000000e+00> : vector<8xf32>
    %22 = vector.multi_reduction <add>, %21, %cst_4 [1] : vector<8x8xf32> to vector<8xf32>
    %23 = vector.shape_cast %22 : vector<8xf32> to vector<8x1xf32>
    %24 = math.rsqrt %23 : vector<8x1xf32>
    %c0_5 = arith.constant 0 : index
    %c0_6 = arith.constant 0 : index
    %25 = vector.load %arg3[%c0_5, %c0_6] : memref<8x16xf32, #tpu.memory_space<vmem>>, vector<8x16xf32>
    %26 = vector.broadcast %24 : vector<8x1xf32> to vector<8x16xf32>
    %27 = arith.mulf %25, %26 : vector<8x16xf32>
    %cst_7 = arith.constant dense<0.000000e+00> : vector<8x16xf32>
    %28 = tpu.matmul %21, %27, %cst_7 {dimension_numbers = #tpu.dot_dimension_numbers<[1], [0], [0], [1], [0, 0, 1, 1], [], []>} : vector<8x8xf32>, vector<8x16xf32>, vector<8x16xf32> -> vector<8x16xf32>
    %c0_8 = arith.constant 0 : index
    %c0_9 = arith.constant 0 : index
    %29 = vector.load %arg4[%c0_8, %c0_9] : memref<16x32xf32, #tpu.memory_space<vmem>>, vector<16x32xf32>
    %cst_10 = arith.constant dense<0.000000e+00> : vector<8x32xf32>
    %30 = tpu.matmul %28, %29, %cst_10 {dimension_numbers = #tpu.dot_dimension_numbers<[1], [0], [0], [1], [0, 0, 1, 1], [], []>} : vector<8x16xf32>, vector<16x32xf32>, vector<8x32xf32> -> vector<8x32xf32>
    %31 = vector.broadcast %24 : vector<8x1xf32> to vector<8x32xf32>
    %32 = arith.mulf %31, %30 : vector<8x32xf32>
    %c0_11 = arith.constant 0 : index
    %c0_12 = arith.constant 0 : index
    %33 = vector.load %arg5[%c0_11, %c0_12] : memref<1x32xf32, #tpu.memory_space<vmem>>, vector<1x32xf32>
    %34 = vector.broadcast %33 : vector<1x32xf32> to vector<8x32xf32>
    %35 = arith.addf %32, %34 : vector<8x32xf32>
    %cst_13 = arith.constant 0.000000e+00 : f32
    %36 = vector.broadcast %cst_13 : f32 to vector<8x32xf32>
    %37 = arith.maximumf %35, %36 : vector<8x32xf32>
    %38 = tpu.iota {dimensions = array<i32: 1>} : vector<12x8xi32>
    %c0_14 = arith.constant 0 : index
    %c0_15 = arith.constant 0 : index
    %39 = vector.load %arg2[%c0_14, %c0_15] : memref<12x1xi32, #tpu.memory_space<vmem>>, vector<12x1xi32>
    %40 = vector.broadcast %39 : vector<12x1xi32> to vector<12x8xi32>
    %41 = arith.cmpi eq, %38, %40 : vector<12x8xi32>
    %42 = arith.extui %41 : vector<12x8xi1> to vector<12x8xi32>
    %43 = arith.sitofp %42 : vector<12x8xi32> to vector<12x8xf32>
    %c0_16 = arith.constant 0 : index
    %c0_17 = arith.constant 0 : index
    %44 = vector.load %arg6[%c0_16, %c0_17] : memref<32x32xf32, #tpu.memory_space<vmem>>, vector<32x32xf32>
    %cst_18 = arith.constant dense<0.000000e+00> : vector<8x32xf32>
    %45 = tpu.matmul %37, %44, %cst_18 {dimension_numbers = #tpu.dot_dimension_numbers<[1], [0], [0], [1], [0, 0, 1, 1], [], []>} : vector<8x32xf32>, vector<32x32xf32>, vector<8x32xf32> -> vector<8x32xf32>
    %cst_19 = arith.constant dense<0.000000e+00> : vector<12x32xf32>
    %46 = tpu.matmul %43, %45, %cst_19 {dimension_numbers = #tpu.dot_dimension_numbers<[1], [0], [0], [1], [0, 0, 1, 1], [], []>} : vector<12x8xf32>, vector<8x32xf32>, vector<12x32xf32> -> vector<12x32xf32>
    %c0_20 = arith.constant 0 : index
    %c0_21 = arith.constant 0 : index
    %47 = vector.load %arg7[%c0_20, %c0_21] : memref<1x32xf32, #tpu.memory_space<vmem>>, vector<1x32xf32>
    %48 = vector.broadcast %47 : vector<1x32xf32> to vector<12x32xf32>
    %49 = arith.addf %46, %48 : vector<12x32xf32>
    %cst_22 = arith.constant 0.000000e+00 : f32
    %50 = vector.broadcast %cst_22 : f32 to vector<12x32xf32>
    %51 = arith.maximumf %49, %50 : vector<12x32xf32>
    %c0_23 = arith.constant 0 : index
    %c0_24 = arith.constant 0 : index
    %52 = vector.load %arg8[%c0_23, %c0_24] : memref<32x16xf32, #tpu.memory_space<vmem>>, vector<32x16xf32>
    %cst_25 = arith.constant dense<0.000000e+00> : vector<12x16xf32>
    %53 = tpu.matmul %51, %52, %cst_25 {dimension_numbers = #tpu.dot_dimension_numbers<[1], [0], [0], [1], [0, 0, 1, 1], [], []>} : vector<12x32xf32>, vector<32x16xf32>, vector<12x16xf32> -> vector<12x16xf32>
    %c0_26 = arith.constant 0 : index
    %c0_27 = arith.constant 0 : index
    %54 = vector.load %arg9[%c0_26, %c0_27] : memref<1x16xf32, #tpu.memory_space<vmem>>, vector<1x16xf32>
    %55 = vector.broadcast %54 : vector<1x16xf32> to vector<12x16xf32>
    %56 = arith.addf %53, %55 : vector<12x16xf32>
    %57 = vector.extract_strided_slice %56 {offsets = [0, 0], sizes = [4, 16], strides = [1, 1]} : vector<12x16xf32> to vector<4x16xf32>
    %58 = vector.extract_strided_slice %56 {offsets = [4, 0], sizes = [4, 16], strides = [1, 1]} : vector<12x16xf32> to vector<4x16xf32>
    %59 = vector.extract_strided_slice %56 {offsets = [8, 0], sizes = [4, 16], strides = [1, 1]} : vector<12x16xf32> to vector<4x16xf32>
    %60 = arith.subf %57, %58 : vector<4x16xf32>
    %61 = arith.mulf %60, %60 : vector<4x16xf32>
    %cst_28 = arith.constant dense<0.000000e+00> : vector<4xf32>
    %62 = vector.multi_reduction <add>, %61, %cst_28 [1] : vector<4x16xf32> to vector<4xf32>
    %63 = vector.shape_cast %62 : vector<4xf32> to vector<4x1xf32>
    %64 = arith.subf %57, %59 : vector<4x16xf32>
    %65 = arith.mulf %64, %64 : vector<4x16xf32>
    %cst_29 = arith.constant dense<0.000000e+00> : vector<4xf32>
    %66 = vector.multi_reduction <add>, %65, %cst_29 [1] : vector<4x16xf32> to vector<4xf32>
    %67 = vector.shape_cast %66 : vector<4xf32> to vector<4x1xf32>
    %68 = arith.subf %63, %67 : vector<4x1xf32>
    %cst_30 = arith.constant 1.000000e+00 : f32
    %69 = vector.broadcast %cst_30 : f32 to vector<4x1xf32>
    %70 = arith.addf %68, %69 : vector<4x1xf32>
    %cst_31 = arith.constant 0.000000e+00 : f32
    %71 = vector.broadcast %cst_31 : f32 to vector<4x1xf32>
    %72 = arith.maximumf %70, %71 : vector<4x1xf32>
    %73 = vector.shape_cast %72 : vector<4x1xf32> to vector<1x4x1xf32>
    %cst_32 = arith.constant dense<0.000000e+00> : vector<1xf32>
    %74 = vector.multi_reduction <add>, %73, %cst_32 [1, 2] : vector<1x4x1xf32> to vector<1xf32>
    %75 = vector.shape_cast %74 : vector<1xf32> to vector<1x1x1xf32>
    %76 = vector.extract %75[0, 0, 0] : f32 from vector<1x1x1xf32>
    %cst_33 = arith.constant 2.500000e-01 : f32
    %77 = arith.mulf %76, %cst_33 : f32
    %c0_34 = arith.constant 0 : index
    %c0_35 = arith.constant 0 : index
    %78 = memref.load %arg10[%c0_34, %c0_35] : memref<1x1xf32, #tpu.memory_space<smem>>
    memref.store %77, %arg10[%c0_34, %c0_35] : memref<1x1xf32, #tpu.memory_space<smem>>
    return
  }
  func.func @transform_0(%arg0: i32) -> (i32, i32) {
    %c0_i32 = arith.constant 0 : i32
    %c0_i32_0 = arith.constant 0 : i32
    %c0_i32_1 = arith.constant 0 : i32
    return %c0_i32, %c0_i32_0 : i32, i32
  }
  func.func @transform_1(%arg0: i32) -> (i32, i32) {
    %c0_i32 = arith.constant 0 : i32
    %c0_i32_0 = arith.constant 0 : i32
    %c0_i32_1 = arith.constant 0 : i32
    return %c0_i32, %c0_i32_0 : i32, i32
  }
  func.func @transform_2(%arg0: i32) -> (i32, i32) {
    %c0_i32 = arith.constant 0 : i32
    %c0_i32_0 = arith.constant 0 : i32
    %c0_i32_1 = arith.constant 0 : i32
    return %c0_i32, %c0_i32_0 : i32, i32
  }
  func.func @transform_3(%arg0: i32) -> (i32, i32) {
    %c0_i32 = arith.constant 0 : i32
    %c0_i32_0 = arith.constant 0 : i32
    %c0_i32_1 = arith.constant 0 : i32
    return %c0_i32, %c0_i32_0 : i32, i32
  }
  func.func @transform_4(%arg0: i32) -> (i32, i32) {
    %c0_i32 = arith.constant 0 : i32
    %c0_i32_0 = arith.constant 0 : i32
    %c0_i32_1 = arith.constant 0 : i32
    return %c0_i32, %c0_i32_0 : i32, i32
  }
  func.func @transform_5(%arg0: i32) -> (i32, i32) {
    %c0_i32 = arith.constant 0 : i32
    %c0_i32_0 = arith.constant 0 : i32
    %c0_i32_1 = arith.constant 0 : i32
    return %c0_i32, %c0_i32_0 : i32, i32
  }
  func.func @transform_6(%arg0: i32) -> (i32, i32) {
    %c0_i32 = arith.constant 0 : i32
    %c0_i32_0 = arith.constant 0 : i32
    %c0_i32_1 = arith.constant 0 : i32
    return %c0_i32, %c0_i32_0 : i32, i32
  }
  func.func @transform_7(%arg0: i32) -> (i32, i32) {
    %c0_i32 = arith.constant 0 : i32
    %c0_i32_0 = arith.constant 0 : i32
    %c0_i32_1 = arith.constant 0 : i32
    return %c0_i32, %c0_i32_0 : i32, i32
  }
  func.func @transform_8(%arg0: i32) -> (i32, i32) {
    %c0_i32 = arith.constant 0 : i32
    %c0_i32_0 = arith.constant 0 : i32
    %c0_i32_1 = arith.constant 0 : i32
    return %c0_i32, %c0_i32_0 : i32, i32
  }
  func.func @transform_9(%arg0: i32) -> (i32, i32) {
    %c0_i32 = arith.constant 0 : i32
    %c0_i32_0 = arith.constant 0 : i32
    %c0_i32_1 = arith.constant 0 : i32
    return %c0_i32, %c0_i32_0 : i32, i32
  }
}

</mosaic_0001>

<llo_original>
// kernel: tpu_custom_call.1
$region0: #{tpu_custom_call.1}
  #allocation0 [shape = 'u32[]', space=smem, size = 0x4, offset = 0x4, fixed_abs, tag = 'smem constant byte address 0x4 - core index']
  #allocation1 [shape = 'u32[144,128]{1,0:T(1,128)}', space=vmem, size = 0x12000, scoped, tag = 'internal scratch']
  %s0 = inlined_call_operand.vmem [shape: s32[2,8], index: 0, kind: input, shape index: {}]
  %s1 = inlined_call_operand.vmem [shape: s32[12,1], index: 1, kind: input, shape index: {}]
  %s2 = inlined_call_operand.vmem [shape: f32[8,16], index: 2, kind: input, shape index: {}]
  %s3 = inlined_call_operand.vmem [shape: f32[16,32], index: 3, kind: input, shape index: {}]
  %s4 = inlined_call_operand.vmem [shape: f32[1,32], index: 4, kind: input, shape index: {}]
  %s5 = inlined_call_operand.vmem [shape: f32[32,32], index: 5, kind: input, shape index: {}]
  %s6 = inlined_call_operand.vmem [shape: f32[1,32], index: 6, kind: input, shape index: {}]
  %s7 = inlined_call_operand.vmem [shape: f32[32,16], index: 7, kind: input, shape index: {}]
  %s8 = inlined_call_operand.vmem [shape: f32[1,16], index: 8, kind: input, shape index: {}]
  %s9 = inlined_call_operand.hbm [shape: f32[1,1], index: 9, kind: output, shape index: {}]
  %s10 = sld [smem:[#allocation0]]
  $region46: #{tpu_custom_call.1} parent=0
    _
  %s12 = ssub.s32 1, %s10
  %s13 = scalar_select 0, %s12, %s10
  $region1: #{tpu_custom_call.1} parent=0
    #allocation2 [shape = 'u8[512]{0}', space=smem, size = 0x200, scoped, tag = 'output window, operand 0, single buffered']
    #allocation3 [shape = 's32[1]{0}', space=sflag, size = 0x4, scoped, tag = 'scoped memory for tpu_custom_call.1']
    %14 = vsyncpa [#allocation3], 0
    // Predicated region
    $region2: #{tpu_custom_call.1} parent=1 // pred_check
      _
    $region3: #{tpu_custom_call.1} parent=1 // pred_check_branch
      %16 = sbr.rel (0) target = $region5
    $region4: #{tpu_custom_call.1} parent=1 // pred_region
      _
    $region5: #{tpu_custom_call.1} parent=1 // pred_fallthru
      _
    // Predicated region
    $region6: #{tpu_custom_call.1} parent=1 // pred_check
      _
    $region7: #{tpu_custom_call.1} parent=1 // pred_check_branch
      %18 = sbr.rel (0) target = $region9
    $region8: #{tpu_custom_call.1} parent=1 // pred_region
      _
    $region9: #{tpu_custom_call.1} parent=1 // pred_fallthru
      _
    // Predicated region
    $region10: #{tpu_custom_call.1} parent=1 // pred_check
      _
    $region11: #{tpu_custom_call.1} parent=1 // pred_check_branch
      %20 = sbr.rel (0) target = $region13
    $region12: #{tpu_custom_call.1} parent=1 // pred_region
      _
    $region13: #{tpu_custom_call.1} parent=1 // pred_fallthru
      _
    // Predicated region
    $region14: #{tpu_custom_call.1} parent=1 // pred_check
      _
    $region15: #{tpu_custom_call.1} parent=1 // pred_check_branch
      %22 = sbr.rel (0) target = $region17
    $region16: #{tpu_custom_call.1} parent=1 // pred_region
      _
    $region17: #{tpu_custom_call.1} parent=1 // pred_fallthru
      _
    // Predicated region
    $region18: #{tpu_custom_call.1} parent=1 // pred_check
      _
    $region19: #{tpu_custom_call.1} parent=1 // pred_check_branch
      %24 = sbr.rel (0) target = $region21
    $region20: #{tpu_custom_call.1} parent=1 // pred_region
      _
    $region21: #{tpu_custom_call.1} parent=1 // pred_fallthru
      _
    // Predicated region
    $region22: #{tpu_custom_call.1} parent=1 // pred_check
      _
    $region23: #{tpu_custom_call.1} parent=1 // pred_check_branch
      %26 = sbr.rel (0) target = $region25
    $region24: #{tpu_custom_call.1} parent=1 // pred_region
      _
    $region25: #{tpu_custom_call.1} parent=1 // pred_fallthru
      _
    // Predicated region
    $region26: #{tpu_custom_call.1} parent=1 // pred_check
      _
    $region27: #{tpu_custom_call.1} parent=1 // pred_check_branch
      %28 = sbr.rel (0) target = $region29
    $region28: #{tpu_custom_call.1} parent=1 // pred_region
      _
    $region29: #{tpu_custom_call.1} parent=1 // pred_fallthru
      _
    // Predicated region
    $region30: #{tpu_custom_call.1} parent=1 // pred_check
      _
    $region31: #{tpu_custom_call.1} parent=1 // pred_check_branch
      %30 = sbr.rel (0) target = $region33
    $region32: #{tpu_custom_call.1} parent=1 // pred_region
      _
    $region33: #{tpu_custom_call.1} parent=1 // pred_fallthru
      _
    // Predicated region
    $region34: #{tpu_custom_call.1} parent=1 // pred_check
      _
    $region35: #{tpu_custom_call.1} parent=1 // pred_check_branch
      %32 = sbr.rel (0) target = $region37
    $region36: #{tpu_custom_call.1} parent=1 // pred_region
      _
    $region37: #{tpu_custom_call.1} parent=1 // pred_fallthru
      _
    %v33 = vld [vmem:[%s0] sm:$0x1]
    %v34 = vld [vmem:[%s0 + $0x1] sm:$0x1]
    %v35 = vlaneseq
    %v36 = vshrl.u32 %v35, 7
    %v37 = vlaneseq
    %v38 = vshrl.u32 %v37, 7
    %v39 = vsub.s32 0, %v38
    %v40 = vrot.slane %v33, %v39
    %vm41 = vcmp.eq.s32.totalorder %v36, %v40
    %v42 = vsel %vm41, 1, 0
    %v43 = vcvt.s32.f32 %v42
    %v44 = vlaneseq
    %v45 = vshrl.u32 %v44, 7
    %v46 = vsub.s32 0, %v45
    %v47 = vrot.slane %v34, %v46
    %vm48 = vcmp.eq.s32.totalorder %v36, %v47
    %v49 = vsel %vm48, 1, 0
    %v50 = vcvt.s32.f32 %v49
    %vm51 = vcmask 64512
    %v53 = vsel %vm51, %v50, 0
    %v56 = vsel %vm51, %v43, 0
    %58 = vmatprep.subr.mxu0 0.0
    %59 = vmatpush1.xpose.msra.mxu0 %v56
    %60 = vmatprep.subr.mxu0 0.0
    %61 = vmatpush1.xpose.msra.mxu0 0.0
    %62 = vmatprep.subr.mxu0 0.0
    %63 = vmatpush1.xpose.msra.mxu0 0.0
    %64 = vmatprep.subr.mxu0 0.0
    %65 = vmatpush1.xpose.msra.mxu0 0.0
    %66 = vmatprep.subr.mxu0 0.0
    %67 = vmatpush1.xpose.msra.mxu0 0.0
    %68 = vmatprep.subr.mxu0 0.0
    %69 = vmatpush1.xpose.msra.mxu0 0.0
    %70 = vmatprep.subr.mxu0 0.0
    %71 = vmatpush1.xpose.msra.mxu0 0.0
    %72 = vmatprep.subr.mxu0 0.0
    %73 = vmatpush1.xpose.msra.mxu0 0.0
    %74 = vmatprep.subr.mxu0 0.0
    %75 = vmatpush1.xpose.msra.mxu0 0.0
    %76 = vmatprep.subr.mxu0 0.0
    %77 = vmatpush1.xpose.msra.mxu0 0.0
    %78 = vmatprep.subr.mxu0 0.0
    %79 = vmatpush1.xpose.msra.mxu0 0.0
    %80 = vmatprep.subr.mxu0 0.0
    %81 = vmatpush1.xpose.msra.mxu0 0.0
    %82 = vmatprep.subr.mxu0 0.0
    %83 = vmatpush1.xpose.msra.mxu0 0.0
    %84 = vmatprep.subr.mxu0 0.0
    %85 = vmatpush1.xpose.msra.mxu0 0.0
    %86 = vmatprep.subr.mxu0 0.0
    %87 = vmatpush1.xpose.msra.mxu0 0.0
    %88 = vmatprep.subr.mxu0 0.0
    %89 = vmatpush1.xpose.msra.mxu0 0.0
    %90 = vmatprep.subr.mxu0 0.0
    %91 = vmatpush1.xpose.msra.mxu0 0.0
    %92 = vmatprep.subr.mxu0 0.0
    %93 = vmatpush1.xpose.msra.mxu0 0.0
    %94 = vmatprep.subr.mxu0 0.0
    %95 = vmatpush1.xpose.msra.mxu0 0.0
    %96 = vmatprep.subr.mxu0 0.0
    %97 = vmatpush1.xpose.msra.mxu0 0.0
    %98 = vmatprep.subr.mxu0 0.0
    %99 = vmatpush1.xpose.msra.mxu0 0.0
    %100 = vmatprep.subr.mxu0 0.0
    %101 = vmatpush1.xpose.msra.mxu0 0.0
    %102 = vmatprep.subr.mxu0 0.0
    %103 = vmatpush1.xpose.msra.mxu0 0.0
    %104 = vmatprep.subr.mxu0 0.0
    %105 = vmatpush1.xpose.msra.mxu0 0.0
    %106 = vmatprep.subr.mxu0 0.0
    %107 = vmatpush1.xpose.msra.mxu0 0.0
    %108 = vmatprep.subr.mxu0 0.0
    %109 = vmatpush1.xpose.msra.mxu0 0.0
    %110 = vmatprep.subr.mxu0 0.0
    %111 = vmatpush1.xpose.msra.mxu0 0.0
    %112 = vmatprep.subr.mxu0 0.0
    %113 = vmatpush1.xpose.msra.mxu0 0.0
    %114 = vmatprep.subr.mxu0 0.0
    %115 = vmatpush1.xpose.msra.mxu0 0.0
    %116 = vmatprep.subr.mxu0 0.0
    %117 = vmatpush1.xpose.msra.mxu0 0.0
    %118 = vmatprep.subr.mxu0 0.0
    %119 = vmatpush1.xpose.msra.mxu0 0.0
    %120 = vmatprep.subr.mxu0 0.0
    %121 = vmatpush1.xpose.msra.mxu0 0.0
    %122 = vmatprep.mubr.f32.mxu0 0.0
    %123 = vmatmul.mubr.f32.gmra.mrb[0].mxu0 %v53
    %v124 = vpop.f32.mrb[0].mxu0
    %v125 = vadd.f32 0.0, %v124
    %v126 = vpop.f32.mrb[0].mxu0
    %127 = vdwg.mxu0
    %128 = vmatprep.subr.mxu0 0.0
    %129 = vmatpush1.xpose.msra.mxu0 %v53
    %130 = vmatprep.subr.mxu0 0.0
    %131 = vmatpush1.xpose.msra.mxu0 0.0
    %132 = vmatprep.subr.mxu0 0.0
    %133 = vmatpush1.xpose.msra.mxu0 0.0
    %134 = vmatprep.subr.mxu0 0.0
    %135 = vmatpush1.xpose.msra.mxu0 0.0
    %136 = vmatprep.subr.mxu0 0.0
    %137 = vmatpush1.xpose.msra.mxu0 0.0
    %138 = vmatprep.subr.mxu0 0.0
    %139 = vmatpush1.xpose.msra.mxu0 0.0
    %140 = vmatprep.subr.mxu0 0.0
    %141 = vmatpush1.xpose.msra.mxu0 0.0
    %142 = vmatprep.subr.mxu0 0.0
    %143 = vmatpush1.xpose.msra.mxu0 0.0
    %144 = vmatprep.subr.mxu0 0.0
    %145 = vmatpush1.xpose.msra.mxu0 0.0
    %146 = vmatprep.subr.mxu0 0.0
    %147 = vmatpush1.xpose.msra.mxu0 0.0
    %148 = vmatprep.subr.mxu0 0.0
    %149 = vmatpush1.xpose.msra.mxu0 0.0
    %150 = vmatprep.subr.mxu0 0.0
    %151 = vmatpush1.xpose.msra.mxu0 0.0
    %152 = vmatprep.subr.mxu0 0.0
    %153 = vmatpush1.xpose.msra.mxu0 0.0
    %154 = vmatprep.subr.mxu0 0.0
    %155 = vmatpush1.xpose.msra.mxu0 0.0
    %156 = vmatprep.subr.mxu0 0.0
    %157 = vmatpush1.xpose.msra.mxu0 0.0
    %158 = vmatprep.subr.mxu0 0.0
    %159 = vmatpush1.xpose.msra.mxu0 0.0
    %160 = vmatprep.subr.mxu0 0.0
    %161 = vmatpush1.xpose.msra.mxu0 0.0
    %162 = vmatprep.subr.mxu0 0.0
    %163 = vmatpush1.xpose.msra.mxu0 0.0
    %164 = vmatprep.subr.mxu0 0.0
    %165 = vmatpush1.xpose.msra.mxu0 0.0
    %166 = vmatprep.subr.mxu0 0.0
    %167 = vmatpush1.xpose.msra.mxu0 0.0
    %168 = vmatprep.subr.mxu0 0.0
    %169 = vmatpush1.xpose.msra.mxu0 0.0
    %170 = vmatprep.subr.mxu0 0.0
    %171 = vmatpush1.xpose.msra.mxu0 0.0
    %172 = vmatprep.subr.mxu0 0.0
    %173 = vmatpush1.xpose.msra.mxu0 0.0
    %174 = vmatprep.subr.mxu0 0.0
    %175 = vmatpush1.xpose.msra.mxu0 0.0
    %176 = vmatprep.subr.mxu0 0.0
    %177 = vmatpush1.xpose.msra.mxu0 0.0
    %178 = vmatprep.subr.mxu0 0.0
    %179 = vmatpush1.xpose.msra.mxu0 0.0
    %180 = vmatprep.subr.mxu0 0.0
    %181 = vmatpush1.xpose.msra.mxu0 0.0
    %182 = vmatprep.subr.mxu0 0.0
    %183 = vmatpush1.xpose.msra.mxu0 0.0
    %184 = vmatprep.subr.mxu0 0.0
    %185 = vmatpush1.xpose.msra.mxu0 0.0
    %186 = vmatprep.subr.mxu0 0.0
    %187 = vmatpush1.xpose.msra.mxu0 0.0
    %188 = vmatprep.subr.mxu0 0.0
    %189 = vmatpush1.xpose.msra.mxu0 0.0
    %190 = vmatprep.subr.mxu0 0.0
    %191 = vmatpush1.xpose.msra.mxu0 0.0
    %192 = vmatprep.mubr.f32.mxu0 0.0
    %193 = vmatmul.mubr.f32.gmra.mrb[0].mxu0 %v56
    %v194 = vpop.f32.mrb[0].mxu0
    %v195 = vadd.f32 %v125, %v194
    %v196 = vpop.f32.mrb[0].mxu0
    %197 = vdwg.mxu0
    %v198 = vmin.f32 %v195, 1.0
    %v199 = vlaneseq
    %v200 = vand.u32 %v199, 127
    %vm201 = vcmp.eq.s32.totalorder %v36, %v200
    %v202 = vsel %vm201, 1, 0
    %v203 = vcvt.s32.f32 %v202
    %v204 = vadd.f32 %v198, %v203
    %v205 = vsel %vm51, %v204, 0.0
    %206 = vadd.xlane.f32.xlu0 %v205
    %v207 = vpop.xlane.xlu0 %206
    %v208 = vrsqrt.pop %v207
    %v209 = vld [vmem:[%s2] sm:$0xff]
    %v210 = vmul.f32 %v209, %v208
    %v212 = vsel %vm51, %v204, 0
    %214 = vmatprep.subr.mxu0 0.0
    %215 = vmatpush1.msra.mxu0 %v210
    %216 = vmatprep.subr.mxu0 0.0
    %217 = vmatpush1.msra.mxu0 0.0
    %218 = vmatprep.subr.mxu0 0.0
    %219 = vmatpush1.msra.mxu0 0.0
    %220 = vmatprep.subr.mxu0 0.0
    %221 = vmatpush1.msra.mxu0 0.0
    %222 = vmatprep.subr.mxu0 0.0
    %223 = vmatpush1.msra.mxu0 0.0
    %224 = vmatprep.subr.mxu0 0.0
    %225 = vmatpush1.msra.mxu0 0.0
    %226 = vmatprep.subr.mxu0 0.0
    %227 = vmatpush1.msra.mxu0 0.0
    %228 = vmatprep.subr.mxu0 0.0
    %229 = vmatpush1.msra.mxu0 0.0
    %230 = vmatprep.subr.mxu0 0.0
    %231 = vmatpush1.msra.mxu0 0.0
    %232 = vmatprep.subr.mxu0 0.0
    %233 = vmatpush1.msra.mxu0 0.0
    %234 = vmatprep.subr.mxu0 0.0
    %235 = vmatpush1.msra.mxu0 0.0
    %236 = vmatprep.subr.mxu0 0.0
    %237 = vmatpush1.msra.mxu0 0.0
    %238 = vmatprep.subr.mxu0 0.0
    %239 = vmatpush1.msra.mxu0 0.0
    %240 = vmatprep.subr.mxu0 0.0
    %241 = vmatpush1.msra.mxu0 0.0
    %242 = vmatprep.subr.mxu0 0.0
    %243 = vmatpush1.msra.mxu0 0.0
    %244 = vmatprep.subr.mxu0 0.0
    %245 = vmatpush1.msra.mxu0 0.0
    %246 = vmatprep.subr.mxu0 0.0
    %247 = vmatpush1.msra.mxu0 0.0
    %248 = vmatprep.subr.mxu0 0.0
    %249 = vmatpush1.msra.mxu0 0.0
    %250 = vmatprep.subr.mxu0 0.0
    %251 = vmatpush1.msra.mxu0 0.0
    %252 = vmatprep.subr.mxu0 0.0
    %253 = vmatpush1.msra.mxu0 0.0
    %254 = vmatprep.subr.mxu0 0.0
    %255 = vmatpush1.msra.mxu0 0.0
    %256 = vmatprep.subr.mxu0 0.0
    %257 = vmatpush1.msra.mxu0 0.0
    %258 = vmatprep.subr.mxu0 0.0
    %259 = vmatpush1.msra.mxu0 0.0
    %260 = vmatprep.subr.mxu0 0.0
    %261 = vmatpush1.msra.mxu0 0.0
    %262 = vmatprep.subr.mxu0 0.0
    %263 = vmatpush1.msra.mxu0 0.0
    %264 = vmatprep.subr.mxu0 0.0
    %265 = vmatpush1.msra.mxu0 0.0
    %266 = vmatprep.subr.mxu0 0.0
    %267 = vmatpush1.msra.mxu0 0.0
    %268 = vmatprep.subr.mxu0 0.0
    %269 = vmatpush1.msra.mxu0 0.0
    %270 = vmatprep.subr.mxu0 0.0
    %271 = vmatpush1.msra.mxu0 0.0
    %272 = vmatprep.subr.mxu0 0.0
    %273 = vmatpush1.msra.mxu0 0.0
    %274 = vmatprep.subr.mxu0 0.0
    %275 = vmatpush1.msra.mxu0 0.0
    %276 = vmatprep.subr.mxu0 0.0
    %277 = vmatpush1.msra.mxu0 0.0
    %278 = vmatprep.mubr.f32.mxu0 0.0
    %279 = vmatmul.mubr.f32.gmra.mrb[0].mxu0 %v212
    %v280 = vpop.f32.mrb[0].mxu0
    %v281 = vadd.f32 0.0, %v280
    %v282 = vpop.f32.mrb[0].mxu0
    %283 = vdwg.mxu0
    %v284 = vld [vmem:[%s3] sm:$0xff]
    %v285 = vld [vmem:[%s3 + $0x8] sm:$0xff]
    %vm286 = vcmask 130048
    %v288 = vsel %vm286, %v281, 0
    %290 = vmatprep.subr.mxu0 0.0
    %291 = vmatpush1.msra.mxu0 %v284
    %292 = vmatprep.subr.mxu0 0.0
    %293 = vmatpush1.msra.mxu0 %v285
    %294 = vmatprep.subr.mxu0 0.0
    %295 = vmatpush1.msra.mxu0 0.0
    %296 = vmatprep.subr.mxu0 0.0
    %297 = vmatpush1.msra.mxu0 0.0
    %298 = vmatprep.subr.mxu0 0.0
    %299 = vmatpush1.msra.mxu0 0.0
    %300 = vmatprep.subr.mxu0 0.0
    %301 = vmatpush1.msra.mxu0 0.0
    %302 = vmatprep.subr.mxu0 0.0
    %303 = vmatpush1.msra.mxu0 0.0
    %304 = vmatprep.subr.mxu0 0.0
    %305 = vmatpush1.msra.mxu0 0.0
    %306 = vmatprep.subr.mxu0 0.0
    %307 = vmatpush1.msra.mxu0 0.0
    %308 = vmatprep.subr.mxu0 0.0
    %309 = vmatpush1.msra.mxu0 0.0
    %310 = vmatprep.subr.mxu0 0.0
    %311 = vmatpush1.msra.mxu0 0.0
    %312 = vmatprep.subr.mxu0 0.0
    %313 = vmatpush1.msra.mxu0 0.0
    %314 = vmatprep.subr.mxu0 0.0
    %315 = vmatpush1.msra.mxu0 0.0
    %316 = vmatprep.subr.mxu0 0.0
    %317 = vmatpush1.msra.mxu0 0.0
    %318 = vmatprep.subr.mxu0 0.0
    %319 = vmatpush1.msra.mxu0 0.0
    %320 = vmatprep.subr.mxu0 0.0
    %321 = vmatpush1.msra.mxu0 0.0
    %322 = vmatprep.subr.mxu0 0.0
    %323 = vmatpush1.msra.mxu0 0.0
    %324 = vmatprep.subr.mxu0 0.0
    %325 = vmatpush1.msra.mxu0 0.0
    %326 = vmatprep.subr.mxu0 0.0
    %327 = vmatpush1.msra.mxu0 0.0
    %328 = vmatprep.subr.mxu0 0.0
    %329 = vmatpush1.msra.mxu0 0.0
    %330 = vmatprep.subr.mxu0 0.0
    %331 = vmatpush1.msra.mxu0 0.0
    %332 = vmatprep.subr.mxu0 0.0
    %333 = vmatpush1.msra.mxu0 0.0
    %334 = vmatprep.subr.mxu0 0.0
    %335 = vmatpush1.msra.mxu0 0.0
    %336 = vmatprep.subr.mxu0 0.0
    %337 = vmatpush1.msra.mxu0 0.0
    %338 = vmatprep.subr.mxu0 0.0
    %339 = vmatpush1.msra.mxu0 0.0
    %340 = vmatprep.subr.mxu0 0.0
    %341 = vmatpush1.msra.mxu0 0.0
    %342 = vmatprep.subr.mxu0 0.0
    %343 = vmatpush1.msra.mxu0 0.0
    %344 = vmatprep.subr.mxu0 0.0
    %345 = vmatpush1.msra.mxu0 0.0
    %346 = vmatprep.subr.mxu0 0.0
    %347 = vmatpush1.msra.mxu0 0.0
    %348 = vmatprep.subr.mxu0 0.0
    %349 = vmatpush1.msra.mxu0 0.0
    %350 = vmatprep.subr.mxu0 0.0
    %351 = vmatpush1.msra.mxu0 0.0
    %352 = vmatprep.subr.mxu0 0.0
    %353 = vmatpush1.msra.mxu0 0.0
    %354 = vmatprep.mubr.f32.mxu0 0.0
    %355 = vmatmul.mubr.f32.gmra.mrb[0].mxu0 %v288
    %v356 = vpop.f32.mrb[0].mxu0
    %v357 = vadd.f32 0.0, %v356
    %v358 = vpop.f32.mrb[0].mxu0
    %359 = vdwg.mxu0
    %v360 = vmul.f32 %v208, %v357
    %v361 = vld [vmem:[%s4] sm:$0x1]
    %v363 = vlaneseq
    %v364 = vshrl.u32 %v363, 7
    %v365 = vsub.s32 0, %v364
    %v366 = vrot.slane %v361, %v365
    %v368 = vadd.f32 %v360, %v366
    %v369 = vmax.f32 %v368, 0.0
    %v370 = vld [vmem:[%s1] sm:$0xff]
    %v371 = vld [vmem:[%s1 + $0x8] sm:$0xf]
    %372 = vset.pattern.permute.xlu0 0
    %373 = vperm.xlu0 %372, %v370
    %v374 = vpop.permute.xlu0 %373
    %375 = vset.pattern.permute.xlu0 0
    %376 = vperm.xlu0 %375, %v371
    %v377 = vpop.permute.xlu0 %376
    %vm378 = vcmp.eq.s32.totalorder %v200, %v374
    %vm379 = vcmp.eq.s32.totalorder %v200, %v377
    %v380 = vsel %vm378, 1, 0
    %v381 = vsel %vm379, 1, 0
    %v382 = vcvt.s32.f32 %v380
    %v383 = vcvt.s32.f32 %v381
    %v384 = vld [vmem:[%s5] sm:$0xff]
    %v385 = vld [vmem:[%s5 + $0x8] sm:$0xff]
    %v386 = vld [vmem:[%s5 + $0x10] sm:$0xff]
    %v387 = vld [vmem:[%s5 + $0x18] sm:$0xff]
    %vm388 = vcmask 261120
    %v390 = vsel %vm388, %v369, 0
    %392 = vmatprep.subr.mxu0 0.0
    %393 = vmatpush1.msra.mxu0 %v384
    %394 = vmatprep.subr.mxu0 0.0
    %395 = vmatpush1.msra.mxu0 %v385
    %396 = vmatprep.subr.mxu0 0.0
    %397 = vmatpush1.msra.mxu0 %v386
    %398 = vmatprep.subr.mxu0 0.0
    %399 = vmatpush1.msra.mxu0 %v387
    %400 = vmatprep.subr.mxu0 0.0
    %401 = vmatpush1.msra.mxu0 0.0
    %402 = vmatprep.subr.mxu0 0.0
    %403 = vmatpush1.msra.mxu0 0.0
    %404 = vmatprep.subr.mxu0 0.0
    %405 = vmatpush1.msra.mxu0 0.0
    %406 = vmatprep.subr.mxu0 0.0
    %407 = vmatpush1.msra.mxu0 0.0
    %408 = vmatprep.subr.mxu0 0.0
    %409 = vmatpush1.msra.mxu0 0.0
    %410 = vmatprep.subr.mxu0 0.0
    %411 = vmatpush1.msra.mxu0 0.0
    %412 = vmatprep.subr.mxu0 0.0
    %413 = vmatpush1.msra.mxu0 0.0
    %414 = vmatprep.subr.mxu0 0.0
    %415 = vmatpush1.msra.mxu0 0.0
    %416 = vmatprep.subr.mxu0 0.0
    %417 = vmatpush1.msra.mxu0 0.0
    %418 = vmatprep.subr.mxu0 0.0
    %419 = vmatpush1.msra.mxu0 0.0
    %420 = vmatprep.subr.mxu0 0.0
    %421 = vmatpush1.msra.mxu0 0.0
    %422 = vmatprep.subr.mxu0 0.0
    %423 = vmatpush1.msra.mxu0 0.0
    %424 = vmatprep.subr.mxu0 0.0
    %425 = vmatpush1.msra.mxu0 0.0
    %426 = vmatprep.subr.mxu0 0.0
    %427 = vmatpush1.msra.mxu0 0.0
    %428 = vmatprep.subr.mxu0 0.0
    %429 = vmatpush1.msra.mxu0 0.0
    %430 = vmatprep.subr.mxu0 0.0
    %431 = vmatpush1.msra.mxu0 0.0
    %432 = vmatprep.subr.mxu0 0.0
    %433 = vmatpush1.msra.mxu0 0.0
    %434 = vmatprep.subr.mxu0 0.0
    %435 = vmatpush1.msra.mxu0 0.0
    %436 = vmatprep.subr.mxu0 0.0
    %437 = vmatpush1.msra.mxu0 0.0
    %438 = vmatprep.subr.mxu0 0.0
    %439 = vmatpush1.msra.mxu0 0.0
    %440 = vmatprep.subr.mxu0 0.0
    %441 = vmatpush1.msra.mxu0 0.0
    %442 = vmatprep.subr.mxu0 0.0
    %443 = vmatpush1.msra.mxu0 0.0
    %444 = vmatprep.subr.mxu0 0.0
    %445 = vmatpush1.msra.mxu0 0.0
    %446 = vmatprep.subr.mxu0 0.0
    %447 = vmatpush1.msra.mxu0 0.0
    %448 = vmatprep.subr.mxu0 0.0
    %449 = vmatpush1.msra.mxu0 0.0
    %450 = vmatprep.subr.mxu0 0.0
    %451 = vmatpush1.msra.mxu0 0.0
    %452 = vmatprep.subr.mxu0 0.0
    %453 = vmatpush1.msra.mxu0 0.0
    %454 = vmatprep.subr.mxu0 0.0
    %455 = vmatpush1.msra.mxu0 0.0
    %456 = vmatprep.mubr.f32.mxu0 0.0
    %457 = vmatmul.mubr.f32.gmra.mrb[0].mxu0 %v390
    %v458 = vpop.f32.mrb[0].mxu0
    %v459 = vadd.f32 0.0, %v458
    %v460 = vpop.f32.mrb[0].mxu0
    %461 = vdwg.mxu0
    %v462 = vld [vmem:[%s6] sm:$0x1]
    %v464 = vlaneseq
    %v465 = vshrl.u32 %v464, 7
    %v466 = vsub.s32 0, %v465
    %v467 = vrot.slane %v462, %v466
    %v470 = vsel %vm51, %v382, 0
    %v473 = vsel %vm51, %v383, 0
    %475 = vmatprep.subr.mxu0 0.0
    %476 = vmatpush1.msra.mxu0 %v459
    %477 = vmatprep.subr.mxu0 0.0
    %478 = vmatpush1.msra.mxu0 0.0
    %479 = vmatprep.subr.mxu0 0.0
    %480 = vmatpush1.msra.mxu0 0.0
    %481 = vmatprep.subr.mxu0 0.0
    %482 = vmatpush1.msra.mxu0 0.0
    %483 = vmatprep.subr.mxu0 0.0
    %484 = vmatpush1.msra.mxu0 0.0
    %485 = vmatprep.subr.mxu0 0.0
    %486 = vmatpush1.msra.mxu0 0.0
    %487 = vmatprep.subr.mxu0 0.0
    %488 = vmatpush1.msra.mxu0 0.0
    %489 = vmatprep.subr.mxu0 0.0
    %490 = vmatpush1.msra.mxu0 0.0
    %491 = vmatprep.subr.mxu0 0.0
    %492 = vmatpush1.msra.mxu0 0.0
    %493 = vmatprep.subr.mxu0 0.0
    %494 = vmatpush1.msra.mxu0 0.0
    %495 = vmatprep.subr.mxu0 0.0
    %496 = vmatpush1.msra.mxu0 0.0
    %497 = vmatprep.subr.mxu0 0.0
    %498 = vmatpush1.msra.mxu0 0.0
    %499 = vmatprep.subr.mxu0 0.0
    %500 = vmatpush1.msra.mxu0 0.0
    %501 = vmatprep.subr.mxu0 0.0
    %502 = vmatpush1.msra.mxu0 0.0
    %503 = vmatprep.subr.mxu0 0.0
    %504 = vmatpush1.msra.mxu0 0.0
    %505 = vmatprep.subr.mxu0 0.0
    %506 = vmatpush1.msra.mxu0 0.0
    %507 = vmatprep.subr.mxu0 0.0
    %508 = vmatpush1.msra.mxu0 0.0
    %509 = vmatprep.subr.mxu0 0.0
    %510 = vmatpush1.msra.mxu0 0.0
    %511 = vmatprep.subr.mxu0 0.0
    %512 = vmatpush1.msra.mxu0 0.0
    %513 = vmatprep.subr.mxu0 0.0
    %514 = vmatpush1.msra.mxu0 0.0
    %515 = vmatprep.subr.mxu0 0.0
    %516 = vmatpush1.msra.mxu0 0.0
    %517 = vmatprep.subr.mxu0 0.0
    %518 = vmatpush1.msra.mxu0 0.0
    %519 = vmatprep.subr.mxu0 0.0
    %520 = vmatpush1.msra.mxu0 0.0
    %521 = vmatprep.subr.mxu0 0.0
    %522 = vmatpush1.msra.mxu0 0.0
    %523 = vmatprep.subr.mxu0 0.0
    %524 = vmatpush1.msra.mxu0 0.0
    %525 = vmatprep.subr.mxu0 0.0
    %526 = vmatpush1.msra.mxu0 0.0
    %527 = vmatprep.subr.mxu0 0.0
    %528 = vmatpush1.msra.mxu0 0.0
    %529 = vmatprep.subr.mxu0 0.0
    %530 = vmatpush1.msra.mxu0 0.0
    %531 = vmatprep.subr.mxu0 0.0
    %532 = vmatpush1.msra.mxu0 0.0
    %533 = vmatprep.subr.mxu0 0.0
    %534 = vmatpush1.msra.mxu0 0.0
    %535 = vmatprep.subr.mxu0 0.0
    %536 = vmatpush1.msra.mxu0 0.0
    %537 = vmatprep.subr.mxu0 0.0
    %538 = vmatpush1.msra.mxu0 0.0
    %539 = vmatprep.mubr.f32.mxu0 0.0
    %540 = vmatmul.mubr.f32.gmra.mrb[0].mxu0 %v470
    %v541 = vpop.f32.mrb[0].mxu0
    %v542 = vadd.f32 %v467, %v541
    %v543 = vpop.f32.mrb[0].mxu0
    %544 = vmatprep.mubr.f32.mxu0 0.0
    %545 = vmatmul.mubr.f32.gmra.mrb[0].mxu0 %v473
    %v546 = vpop.f32.mrb[0].mxu0
    %v547 = vadd.f32 %v467, %v546
    %v548 = vpop.f32.mrb[0].mxu0
    %549 = vdwg.mxu0
    %v550 = vmax.f32 %v542, 0.0
    %v551 = vmax.f32 %v547, 0.0
    %v552 = vld [vmem:[%s7] sm:$0xff]
    %v553 = vld [vmem:[%s7 + $0x8] sm:$0xff]
    %v554 = vld [vmem:[%s7 + $0x10] sm:$0xff]
    %v555 = vld [vmem:[%s7 + $0x18] sm:$0xff]
    %v556 = vld [vmem:[%s8] sm:$0x1]
    %v558 = vlaneseq
    %v559 = vshrl.u32 %v558, 7
    %v560 = vsub.s32 0, %v559
    %v561 = vrot.slane %v556, %v560
    %v564 = vsel %vm388, %v550, 0
    %v567 = vsel %vm388, %v551, 0
    %569 = vmatprep.subr.mxu0 0.0
    %570 = vmatpush1.msra.mxu0 %v552
    %571 = vmatprep.subr.mxu0 0.0
    %572 = vmatpush1.msra.mxu0 %v553
    %573 = vmatprep.subr.mxu0 0.0
    %574 = vmatpush1.msra.mxu0 %v554
    %575 = vmatprep.subr.mxu0 0.0
    %576 = vmatpush1.msra.mxu0 %v555
    %577 = vmatprep.subr.mxu0 0.0
    %578 = vmatpush1.msra.mxu0 0.0
    %579 = vmatprep.subr.mxu0 0.0
    %580 = vmatpush1.msra.mxu0 0.0
    %581 = vmatprep.subr.mxu0 0.0
    %582 = vmatpush1.msra.mxu0 0.0
    %583 = vmatprep.subr.mxu0 0.0
    %584 = vmatpush1.msra.mxu0 0.0
    %585 = vmatprep.subr.mxu0 0.0
    %586 = vmatpush1.msra.mxu0 0.0
    %587 = vmatprep.subr.mxu0 0.0
    %588 = vmatpush1.msra.mxu0 0.0
    %589 = vmatprep.subr.mxu0 0.0
    %590 = vmatpush1.msra.mxu0 0.0
    %591 = vmatprep.subr.mxu0 0.0
    %592 = vmatpush1.msra.mxu0 0.0
    %593 = vmatprep.subr.mxu0 0.0
    %594 = vmatpush1.msra.mxu0 0.0
    %595 = vmatprep.subr.mxu0 0.0
    %596 = vmatpush1.msra.mxu0 0.0
    %597 = vmatprep.subr.mxu0 0.0
    %598 = vmatpush1.msra.mxu0 0.0
    %599 = vmatprep.subr.mxu0 0.0
    %600 = vmatpush1.msra.mxu0 0.0
    %601 = vmatprep.subr.mxu0 0.0
    %602 = vmatpush1.msra.mxu0 0.0
    %603 = vmatprep.subr.mxu0 0.0
    %604 = vmatpush1.msra.mxu0 0.0
    %605 = vmatprep.subr.mxu0 0.0
    %606 = vmatpush1.msra.mxu0 0.0
    %607 = vmatprep.subr.mxu0 0.0
    %608 = vmatpush1.msra.mxu0 0.0
    %609 = vmatprep.subr.mxu0 0.0
    %610 = vmatpush1.msra.mxu0 0.0
    %611 = vmatprep.subr.mxu0 0.0
    %612 = vmatpush1.msra.mxu0 0.0
    %613 = vmatprep.subr.mxu0 0.0
    %614 = vmatpush1.msra.mxu0 0.0
    %615 = vmatprep.subr.mxu0 0.0
    %616 = vmatpush1.msra.mxu0 0.0
    %617 = vmatprep.subr.mxu0 0.0
    %618 = vmatpush1.msra.mxu0 0.0
    %619 = vmatprep.subr.mxu0 0.0
    %620 = vmatpush1.msra.mxu0 0.0
    %621 = vmatprep.subr.mxu0 0.0
    %622 = vmatpush1.msra.mxu0 0.0
    %623 = vmatprep.subr.mxu0 0.0
    %624 = vmatpush1.msra.mxu0 0.0
    %625 = vmatprep.subr.mxu0 0.0
    %626 = vmatpush1.msra.mxu0 0.0
    %627 = vmatprep.subr.mxu0 0.0
    %628 = vmatpush1.msra.mxu0 0.0
    %629 = vmatprep.subr.mxu0 0.0
    %630 = vmatpush1.msra.mxu0 0.0
    %631 = vmatprep.subr.mxu0 0.0
    %632 = vmatpush1.msra.mxu0 0.0
    %633 = vmatprep.mubr.f32.mxu0 0.0
    %634 = vmatmul.mubr.f32.gmra.mrb[0].mxu0 %v564
    %v635 = vpop.f32.mrb[0].mxu0
    %v636 = vadd.f32 %v561, %v635
    %v637 = vpop.f32.mrb[0].mxu0
    %638 = vmatprep.mubr.f32.mxu0 0.0
    %639 = vmatmul.mubr.f32.gmra.mrb[0].mxu0 %v567
    %v640 = vpop.f32.mrb[0].mxu0
    %v641 = vadd.f32 %v561, %v640
    %v642 = vpop.f32.mrb[0].mxu0
    %643 = vdwg.mxu0
    %v645 = vrot.slane %v636, 4
    %v647 = vsub.f32 %v636, %v645
    %v648 = vmul.f32 %v647, %v647
    %vm649 = vcmask 125952
    %v650 = vsel %vm649, %v648, 0.0
    %651 = vadd.xlane.f32.xlu0 %v650
    %v652 = vpop.xlane.xlu0 %651
    %v653 = vsub.f32 %v636, %v641
    %v654 = vmul.f32 %v653, %v653
    %v655 = vsel %vm649, %v654, 0.0
    %656 = vadd.xlane.f32.xlu0 %v655
    %v657 = vpop.xlane.xlu0 %656
    %v658 = vsub.f32 %v652, %v657
    %v659 = vadd.f32 %v658, 1.0
    %v660 = vmax.f32 %v659, 0.0
    %vm661 = vcmask 3072
    %v662 = vsel %vm661, %v660, 0.0
    %663 = vadd.xlane.f32.xlu0 %v662
    %v664 = vpop.xlane.xlu0 %663
    %v665 = vrot.slane %v664, 4
    %v666 = vadd.f32 %v664, %v665
    %v667 = vrot.slane %v666, 2
    %v668 = vadd.f32 %v666, %v667
    %v669 = vrot.slane %v668, 1
    %v670 = vadd.f32 %v668, %v669
    %s671 = vtos %v670
    %s672 = smul.f32 %s671, 0.25
    %s673 = scalar_lea.smem [#allocation2], 0
    %674 = sst [smem:[%s673]] %s672
    // Predicated region
    $region38: #{tpu_custom_call.1} parent=1 // pred_check
      _
    $region39: #{tpu_custom_call.1} parent=1 // pred_check_branch
      %676 = sbr.rel (0) target = $region41
    $region40: #{tpu_custom_call.1} parent=1 // pred_region
      %s678 = ssub.s32 16, 16
      %679 = vsyncadd [#allocation3], %s678
      %682 = dma.smem_to_hbm [#allocation2], 16, %s9, [#allocation3]
    $region41: #{tpu_custom_call.1} parent=1 // pred_fallthru
      _
    // Predicated region
    $region42: #{tpu_custom_call.1} parent=1 // pred_check
      _
    $region43: #{tpu_custom_call.1} parent=1 // pred_check_branch
      %684 = sbr.rel (0) target = $region45
    $region44: #{tpu_custom_call.1} parent=1 // pred_region
      %685 = dma.done [#allocation3], 16
    $region45: #{tpu_custom_call.1} parent=1 // pred_fallthru
      _
    %686 = sfence
    %687 = vsyncpa [#allocation3], 1

</llo_original>
